<compile_context>
chip_gen: v6e
topology: v6e:2x2x1
jax: 0.10.0
libtpu: 0.0.40
codegen_flags: <defaults>
</compile_context>

<pallas_src>
import jax
import jax.numpy as jnp
from jax.experimental import pallas as pl
from jax.experimental.pallas import tpu as pltpu

_LANE = 128
_SUBLANE = 8
_LOG_CLAMP = -100.0


def _bce_loss_kernel(pred_ref, gt_ref, w_ref, out_ref, acc_ref):
    step = pl.program_id(0)

    @pl.when(step == 0)
    def _():
        acc_ref[...] = jnp.zeros_like(acc_ref)

    # Cast in-kernel so narrow (e.g. bf16) inputs stay narrow in HBM.
    p = pred_ref[...].astype(jnp.float32)     # (Bt, C)
    y = gt_ref[...].astype(jnp.float32)       # (Bt, C)
    w = w_ref[...]                            # (1, C) match multiplicities (f32)

    # binary_cross_entropy with PyTorch's log clamp at -100.
    log_p = jnp.maximum(jnp.log(p), _LOG_CLAMP)
    log_1mp = jnp.maximum(jnp.log(1.0 - p), _LOG_CLAMP)
    bce = -(y * log_p + (1.0 - y) * log_1mp)

    # Pure element-wise (VPU/EUP) accumulation every step; no per-step XLU
    # reduction, no per-step masked scalar store.
    acc_ref[...] += bce * w

    # One cross-lane reduction + one (1,1) store for the whole kernel.
    @pl.when(step == pl.num_programs(0) - 1)
    def _():
        out_ref[...] = jnp.sum(acc_ref[...], keepdims=True)


def cross_entropy_perm_loss(pred_perm, gt_perm, all_matches):
    """Pallas implementation of CrossEntropyLoss.forward.

    pred_perm, gt_perm: (B, N, M) arrays with values in [0, 1].
    all_matches: list of (row, col) index pairs (Python ints).
    Returns a scalar float32 loss.
    """
    if len(all_matches) == 0:
        return jnp.float32(0.0)

    B, N, M = pred_perm.shape
    NM = N * M
    C = ((NM + _LANE - 1) // _LANE) * _LANE   # lane-dense padded width

    # Flatten to (B, N*M); pad columns with (p=1, y=1) -> BCE exactly 0.
    pred_flat = pred_perm.reshape(B, NM)
    gt_flat = gt_perm.reshape(B, NM)
    if C != NM:
        pred_flat = jnp.pad(pred_flat, ((0, 0), (0, C - NM)), constant_values=1)
        gt_flat = jnp.pad(gt_flat, ((0, 0), (0, C - NM)), constant_values=1)

    # Glue: (1, C) multiplicity of each (r, c) pair in all_matches.
    rows = jnp.asarray([m[0] for m in all_matches], dtype=jnp.int32)
    cols = jnp.asarray([m[1] for m in all_matches], dtype=jnp.int32)
    match_w = jnp.zeros((C,), jnp.float32).at[rows * M + cols].add(1.0)
    match_w = match_w.reshape(1, C)

    # Batch tiling: fold as many batch rows per step as a modest VMEM budget
    # allows (2 inputs x 2 pipeline buffers + f32 accumulator); sized for the
    # smallest (v7x) scoped VMEM.
    itemsize = jnp.dtype(pred_flat.dtype).itemsize
    block_budget_bytes = 2 * 1024 * 1024
    bt_cap = max(_SUBLANE,
                 (block_budget_bytes // (C * itemsize)) // _SUBLANE * _SUBLANE)
    if B <= bt_cap:
        Bt, Bp = B, B
    else:
        Bt = bt_cap
        Bp = ((B + Bt - 1) // Bt) * Bt
        # Padded batch rows also use (p=1, y=1) -> BCE 0.
        pred_flat = jnp.pad(pred_flat, ((0, Bp - B), (0, 0)), constant_values=1)
        gt_flat = jnp.pad(gt_flat, ((0, Bp - B), (0, 0)), constant_values=1)
    num_steps = Bp // Bt

    loss_sum = pl.pallas_call(
        _bce_loss_kernel,
        out_shape=jax.ShapeDtypeStruct((1, 1), jnp.float32),
        grid_spec=pltpu.PrefetchScalarGridSpec(
            num_scalar_prefetch=0,
            grid=(num_steps,),
            in_specs=[
                pl.BlockSpec((Bt, C), lambda i: (i, 0)),
                pl.BlockSpec((Bt, C), lambda i: (i, 0)),
                pl.BlockSpec((1, C), lambda i: (0, 0)),
            ],
            out_specs=pl.BlockSpec((1, 1), lambda i: (0, 0)),
            scratch_shapes=[pltpu.VMEM((Bt, C), jnp.float32)],
        ),
        compiler_params=pltpu.CompilerParams(
            dimension_semantics=("arbitrary",),   # accumulator resident across batch tiles
            vmem_limit_bytes=32 * 1024 * 1024,
        ),
    )(pred_flat, gt_flat, match_w)

    return loss_sum[0, 0] / jnp.float32(len(all_matches))


def _reference_loss(pred_perm, gt_perm, all_matches):
    """Pure-JAX reference mirroring the PyTorch per-element loop."""
    pred_perm = pred_perm.astype(jnp.float32)
    gt_perm = gt_perm.astype(jnp.float32)
    total = jnp.float32(0.0)
    for b in range(pred_perm.shape[0]):
        for (r, c) in all_matches:
            p = pred_perm[b, r, c]
            y = gt_perm[b, r, c]
            lp = jnp.maximum(jnp.log(p), -100.0)
            l1p = jnp.maximum(jnp.log(1.0 - p), -100.0)
            total = total + (-(y * lp + (1.0 - y) * l1p))
    return total / len(all_matches)


if __name__ == "__main__":
    key = jax.random.PRNGKey(0)

    # --- Test 1: permutation ground truth, square N = M = 8 (no padding of NM needed beyond 64->128) ---
    B, N, M = 2, 8, 8
    k1, k2 = jax.random.split(key)
    pred_perm = jax.random.uniform(k1, (B, N, M), dtype=jnp.float32,
                                   minval=0.05, maxval=0.95)
    perm = jax.random.permutation(k2, N)
    gt_perm = jnp.tile(jax.nn.one_hot(perm, M, dtype=jnp.float32)[None], (B, 1, 1))
    all_matches = [(int(r), int(perm[r])) for r in range(N)]

    loss1 = jax.block_until_ready(cross_entropy_perm_loss(pred_perm, gt_perm, all_matches))
    ref1 = _reference_loss(pred_perm, gt_perm, all_matches)
    assert jnp.allclose(loss1, ref1, rtol=1e-5, atol=1e-5), (loss1, ref1)

    # --- Test 2: rectangular N x M with soft targets, duplicate matches, column padding ---
    B2, N2, M2 = 3, 10, 12
    k3, k4 = jax.random.split(k1)
    pred2 = jax.random.uniform(k3, (B2, N2, M2), dtype=jnp.float32,
                               minval=0.02, maxval=0.98)
    gt2 = jax.random.uniform(k4, (B2, N2, M2), dtype=jnp.float32)   # soft targets in [0, 1]
    matches2 = [(0, 5), (3, 7), (9, 11), (0, 5), (4, 0)]            # includes a duplicate

    loss2 = jax.block_until_ready(cross_entropy_perm_loss(pred2, gt2, matches2))
    ref2 = _reference_loss(pred2, gt2, matches2)
    assert jnp.allclose(loss2, ref2, rtol=1e-5, atol=1e-5), (loss2, ref2)

    print("KERNEL_OK")
</pallas_src>

<mosaic_0001>
module attributes {stable_mosaic.version = 11 : i64} {
  func.func @_bce_loss_kernel(%arg0: i32, %arg1: memref<2x128xf32, #tpu.memory_space<vmem>>, %arg2: memref<2x128xf32, #tpu.memory_space<vmem>>, %arg3: memref<1x128xf32, #tpu.memory_space<vmem>>, %arg4: memref<1x1xf32, #tpu.memory_space<vmem>>, %arg5: memref<2x128xf32, #tpu.memory_space<vmem>>) attributes {dimension_semantics = [#tpu.dimension_semantics<arbitrary>], iteration_bounds = array<i64: 1>, scalar_prefetch = 0 : i64, scratch_operands = 1 : i64, tpu.core_type = #tpu.core_type<tc>, window_params = [{transform_indices = @transform_0, window_bounds = array<i64: 2, 128>}, {transform_indices = @transform_1, window_bounds = array<i64: 2, 128>}, {pipeline_mode = #tpu.pipeline_mode<synchronous>, transform_indices = @transform_2, window_bounds = array<i64: 1, 128>}, {pipeline_mode = #tpu.pipeline_mode<synchronous>, transform_indices = @transform_3, window_bounds = array<i64: 1, 1>}]} {
    %c0_i32 = arith.constant 0 : i32
    %0 = arith.cmpi eq, %arg0, %c0_i32 : i32
    %1 = arith.extui %0 : i1 to i32
    %c0_i32_0 = arith.constant 0 : i32
    %2 = arith.cmpi ne, %1, %c0_i32_0 : i32
    scf.if %2 {
      %cst_16 = arith.constant 0.000000e+00 : f32
      %29 = vector.broadcast %cst_16 : f32 to vector<2x128xf32>
      %c0_17 = arith.constant 0 : index
      %c0_18 = arith.constant 0 : index
      %30 = vector.load %arg5[%c0_17, %c0_18] : memref<2x128xf32, #tpu.memory_space<vmem>>, vector<2x128xf32>
      tpu.vector_store %arg5[%c0_17, %c0_18], %29 {strides = array<i32>} : memref<2x128xf32, #tpu.memory_space<vmem>>, vector<2x128xf32>,
    } else {
    }
    %c0 = arith.constant 0 : index
    %c0_1 = arith.constant 0 : index
    %3 = vector.load %arg1[%c0, %c0_1] : memref<2x128xf32, #tpu.memory_space<vmem>>, vector<2x128xf32>
    %c0_2 = arith.constant 0 : index
    %c0_3 = arith.constant 0 : index
    %4 = vector.load %arg2[%c0_2, %c0_3] : memref<2x128xf32, #tpu.memory_space<vmem>>, vector<2x128xf32>
    %c0_4 = arith.constant 0 : index
    %c0_5 = arith.constant 0 : index
    %5 = vector.load %arg3[%c0_4, %c0_5] : memref<1x128xf32, #tpu.memory_space<vmem>>, vector<1x128xf32>
    %6 = math.log %3 : vector<2x128xf32>
    %cst = arith.constant -1.000000e+02 : f32
    %7 = vector.broadcast %cst : f32 to vector<2x128xf32>
    %8 = arith.maximumf %6, %7 : vector<2x128xf32>
    %cst_6 = arith.constant 1.000000e+00 : f32
    %9 = vector.broadcast %cst_6 : f32 to vector<2x128xf32>
    %10 = arith.subf %9, %3 : vector<2x128xf32>
    %11 = math.log %10 : vector<2x128xf32>
    %cst_7 = arith.constant -1.000000e+02 : f32
    %12 = vector.broadcast %cst_7 : f32 to vector<2x128xf32>
    %13 = arith.maximumf %11, %12 : vector<2x128xf32>
    %14 = arith.mulf %4, %8 : vector<2x128xf32>
    %cst_8 = arith.constant 1.000000e+00 : f32
    %15 = vector.broadcast %cst_8 : f32 to vector<2x128xf32>
    %16 = arith.subf %15, %4 : vector<2x128xf32>
    %17 = arith.mulf %16, %13 : vector<2x128xf32>
    %18 = arith.addf %14, %17 : vector<2x128xf32>
    %cst_9 = arith.constant 0.000000e+00 : f32
    %19 = vector.broadcast %cst_9 : f32 to vector<2x128xf32>
    %20 = arith.subf %19, %18 : vector<2x128xf32>
    %c0_10 = arith.constant 0 : index
    %c0_11 = arith.constant 0 : index
    %21 = vector.load %arg5[%c0_10, %c0_11] : memref<2x128xf32, #tpu.memory_space<vmem>>, vector<2x128xf32>
    %22 = vector.broadcast %5 : vector<1x128xf32> to vector<2x128xf32>
    %23 = arith.mulf %20, %22 : vector<2x128xf32>
    %24 = arith.addf %21, %23 : vector<2x128xf32>
    %c0_12 = arith.constant 0 : index
    %c0_13 = arith.constant 0 : index
    %25 = vector.load %arg5[%c0_12, %c0_13] : memref<2x128xf32, #tpu.memory_space<vmem>>, vector<2x128xf32>
    tpu.vector_store %arg5[%c0_12, %c0_13], %24 {strides = array<i32>} : memref<2x128xf32, #tpu.memory_space<vmem>>, vector<2x128xf32>,
    %c0_i32_14 = arith.constant 0 : i32
    %26 = arith.cmpi eq, %arg0, %c0_i32_14 : i32
    %27 = arith.extui %26 : i1 to i32
    %c0_i32_15 = arith.constant 0 : i32
    %28 = arith.cmpi ne, %27, %c0_i32_15 : i32
    scf.if %28 {
      %c0_16 = arith.constant 0 : index
      %c0_17 = arith.constant 0 : index
      %29 = vector.load %arg5[%c0_16, %c0_17] : memref<2x128xf32, #tpu.memory_space<vmem>>, vector<2x128xf32>
      %30 = vector.shape_cast %29 : vector<2x128xf32> to vector<1x2x128xf32>
      %cst_18 = arith.constant dense<0.000000e+00> : vector<1xf32>
      %31 = vector.multi_reduction <add>, %30, %cst_18 [1, 2] : vector<1x2x128xf32> to vector<1xf32>
      %32 = vector.shape_cast %31 : vector<1xf32> to vector<1x1x1xf32>
      %33 = vector.extract %32[0, 0, 0] : f32 from vector<1x1x1xf32>
      %34 = vector.broadcast %33 : f32 to vector<1x1xf32>
      %c0_19 = arith.constant 0 : index
      %c0_20 = arith.constant 0 : index
      %35 = vector.load %arg4[%c0_19, %c0_20] : memref<1x1xf32, #tpu.memory_space<vmem>>, vector<1x1xf32>
      tpu.vector_store %arg4[%c0_19, %c0_20], %34 {strides = array<i32>} : memref<1x1xf32, #tpu.memory_space<vmem>>, vector<1x1xf32>,
    } else {
    }
    return
  }
  func.func @transform_0(%arg0: i32) -> (i32, i32) {
    %c0_i32 = arith.constant 0 : i32
    %c0_i32_0 = arith.constant 0 : i32
    return %arg0, %c0_i32 : i32, i32
  }
  func.func @transform_1(%arg0: i32) -> (i32, i32) {
    %c0_i32 = arith.constant 0 : i32
    %c0_i32_0 = arith.constant 0 : i32
    return %arg0, %c0_i32 : i32, i32
  }
  func.func @transform_2(%arg0: i32) -> (i32, i32) {
    %c0_i32 = arith.constant 0 : i32
    %c0_i32_0 = arith.constant 0 : i32
    %c0_i32_1 = arith.constant 0 : i32
    return %c0_i32, %c0_i32_0 : i32, i32
  }
  func.func @transform_3(%arg0: i32) -> (i32, i32) {
    %c0_i32 = arith.constant 0 : i32
    %c0_i32_0 = arith.constant 0 : i32
    %c0_i32_1 = arith.constant 0 : i32
    return %c0_i32, %c0_i32_0 : i32, i32
  }
}

</mosaic_0001>

<llo_original>
// kernel: tpu_custom_call.1
$region0: #{tpu_custom_call.1}
  #allocation0 [shape = 'u32[]', space=smem, size = 0x4, offset = 0x4, fixed_abs, tag = 'smem constant byte address 0x4 - core index']
  #allocation1 [shape = 'u32[144,128]{1,0:T(1,128)}', space=vmem, size = 0x12000, scoped, tag = 'internal scratch']
  #allocation2 [shape = 'f32[2,128]{1,0:T(2,128)}', space=vmem, size = 0x400, scoped, tag = 'scratch operand']
  %s0 = inlined_call_operand.hbm [shape: f32[2,128], index: 0, kind: input, shape index: {}]
  %s1 = inlined_call_operand.hbm [shape: f32[2,128], index: 1, kind: input, shape index: {}]
  %s2 = inlined_call_operand.vmem [shape: f32[1,128], index: 2, kind: input, shape index: {}]
  %s3 = inlined_call_operand.hbm [shape: f32[1,1], index: 3, kind: output, shape index: {}]
  %s4 = sld [smem:[#allocation0]]
  $region38: #{tpu_custom_call.1} parent=0
    _
  %s6 = ssub.s32 1, %s4
  %s7 = scalar_select 0, %s6, %s4
  $region1: #{tpu_custom_call.1} parent=0
    #allocation3 [shape = 'u8[1024]{0}', space=vmem, size = 0x400, scoped, tag = 'input window, operand 0, single buffered']
    #allocation4 [shape = 's32[1]{0}', space=sflag, size = 0x4, scoped, tag = 'scoped memory for tpu_custom_call.1']
    #allocation5 [shape = 's32[1]{0}', space=sflag, size = 0x4, scoped, tag = 'scoped memory for tpu_custom_call.1']
    #allocation6 [shape = 'u8[1024]{0}', space=vmem, size = 0x400, scoped, tag = 'input window, operand 1, single buffered']
    #allocation7 [shape = 's32[1]{0}', space=sflag, size = 0x4, scoped, tag = 'scoped memory for tpu_custom_call.1']
    #allocation8 [shape = 'u8[512]{0}', space=vmem, size = 0x400, scoped, tag = 'output window, operand 0, single buffered']
    %8 = vsyncpa [#allocation4], 0
    %9 = vsyncpa [#allocation7], 0
    %10 = vsyncpa [#allocation5], 0
    // Predicated region
    $region2: #{tpu_custom_call.1} parent=1 // pred_check
      _
    $region3: #{tpu_custom_call.1} parent=1 // pred_check_branch
      %12 = sbr.rel (0) target = $region5
    $region4: #{tpu_custom_call.1} parent=1 // pred_region
      %s14 = ssub.s32 32, 32
      %15 = vsyncadd [#allocation4], %s14
      %s17 = sshll.u32 [#allocation3], 4
      %s18 = int_to_ptr.vmem [resolvable:$true] %s17
      %20 = dma.hbm_to_vmem [thread:$0]  %s0, 32, %s18, [#allocation4]
    $region5: #{tpu_custom_call.1} parent=1 // pred_fallthru
      _
    // Predicated region
    $region6: #{tpu_custom_call.1} parent=1 // pred_check
      _
    $region7: #{tpu_custom_call.1} parent=1 // pred_check_branch
      %22 = sbr.rel (0) target = $region9
    $region8: #{tpu_custom_call.1} parent=1 // pred_region
      %s24 = ssub.s32 32, 32
      %25 = vsyncadd [#allocation7], %s24
      %s27 = sshll.u32 [#allocation6], 4
      %s28 = int_to_ptr.vmem [resolvable:$true] %s27
      %30 = dma.hbm_to_vmem [thread:$0]  %s1, 32, %s28, [#allocation7]
    $region9: #{tpu_custom_call.1} parent=1 // pred_fallthru
      _
    // Predicated region
    $region10: #{tpu_custom_call.1} parent=1 // pred_check
      _
    $region11: #{tpu_custom_call.1} parent=1 // pred_check_branch
      %32 = sbr.rel (0) target = $region13
    $region12: #{tpu_custom_call.1} parent=1 // pred_region
      _
    $region13: #{tpu_custom_call.1} parent=1 // pred_fallthru
      _
    // Predicated region
    $region14: #{tpu_custom_call.1} parent=1 // pred_check
      _
    $region15: #{tpu_custom_call.1} parent=1 // pred_check_branch
      %34 = sbr.rel (0) target = $region17
    $region16: #{tpu_custom_call.1} parent=1 // pred_region
      %35 = dma.done [#allocation4], 32
    $region17: #{tpu_custom_call.1} parent=1 // pred_fallthru
      _
    // Predicated region
    $region18: #{tpu_custom_call.1} parent=1 // pred_check
      _
    $region19: #{tpu_custom_call.1} parent=1 // pred_check_branch
      %37 = sbr.rel (0) target = $region21
    $region20: #{tpu_custom_call.1} parent=1 // pred_region
      %38 = dma.done [#allocation7], 32
    $region21: #{tpu_custom_call.1} parent=1 // pred_fallthru
      _
    %p39 = scmp.eq.s32.totalorder 0, 0
    // Predicated region
    $region22: #{tpu_custom_call.1} parent=1 // pred_check
      %p40 = pneg %p39
    $region23: #{tpu_custom_call.1} parent=1 // pred_check_branch
      %42 = sbr.rel (%p40) target = $region25
    $region24: #{tpu_custom_call.1} parent=1 // pred_region
      %43 = vst [vmem:[#allocation2] sm:$0x3] 0.0
    $region25: #{tpu_custom_call.1} parent=1 // pred_fallthru
      _
    %v44 = vld [vmem:[#allocation3] sm:$0x3]
    %v45 = vld [vmem:[#allocation6] sm:$0x3]
    %v46 = vld [vmem:[%s2] sm:$0x1]
    %v47 = vlog2.pop %v44
    %v48 = vmul.f32 %v47, 0.6931472
    %v49 = vmax.f32 %v48, -100.0
    %v50 = vsub.f32 1.0, %v44
    %v51 = vlog2.pop %v50
    %v52 = vmul.f32 %v51, 0.6931472
    %v53 = vmax.f32 %v52, -100.0
    %v54 = vmul.f32 %v45, %v49
    %v55 = vsub.f32 1.0, %v45
    %v56 = vmul.f32 %v55, %v53
    %v57 = vadd.f32 %v54, %v56
    %v58 = vsub.f32 0.0, %v57
    %v59 = vld [vmem:[#allocation2] sm:$0x3]
    %v61 = vlaneseq
    %v62 = vshrl.u32 %v61, 7
    %v63 = vsub.s32 0, %v62
    %v64 = vrot.slane %v46, %v63
    %v66 = vmul.f32 %v58, %v64
    %v67 = vadd.f32 %v59, %v66
    %68 = vst [vmem:[#allocation2] sm:$0x3] %v67
    // Predicated region
    $region26: #{tpu_custom_call.1} parent=1 // pred_check
      %p69 = pneg %p39
    $region27: #{tpu_custom_call.1} parent=1 // pred_check_branch
      %71 = sbr.rel (%p69) target = $region29
    $region28: #{tpu_custom_call.1} parent=1 // pred_region
      %v72 = vld [vmem:[#allocation2] sm:$0x3]
      %vm73 = vcmask 1041408
      %v74 = vsel %vm73, %v72, 0.0
      %75 = vadd.xlane.f32.xlu0 %v74
      %v76 = vpop.xlane.xlu0 %75
      %v77 = vrot.slane %v76, 4
      %v78 = vadd.f32 %v76, %v77
      %v79 = vrot.slane %v78, 2
      %v80 = vadd.f32 %v78, %v79
      %v81 = vrot.slane %v80, 1
      %v82 = vadd.f32 %v80, %v81
      %s83 = vtos %v82
      %v84 = vstv %s83
      %vm85 = vcmask 0
      %86 = vst.msk [vmem:[#allocation8] sm:$0x1] %vm85, %v84
    $region29: #{tpu_custom_call.1} parent=1 // pred_fallthru
      _
    // Predicated region
    $region30: #{tpu_custom_call.1} parent=1 // pred_check
      _
    $region31: #{tpu_custom_call.1} parent=1 // pred_check_branch
      %88 = sbr.rel (0) target = $region33
    $region32: #{tpu_custom_call.1} parent=1 // pred_region
      %s90 = ssub.s32 16, 16
      %91 = vsyncadd [#allocation5], %s90
      %s93 = sshll.u32 [#allocation8], 4
      %s94 = int_to_ptr.vmem [resolvable:$true] %s93
      %96 = dma.vmem_to_hbm [thread:$0]  %s94, 16, %s3, [#allocation5]
    $region33: #{tpu_custom_call.1} parent=1 // pred_fallthru
      _
    // Predicated region
    $region34: #{tpu_custom_call.1} parent=1 // pred_check
      _
    $region35: #{tpu_custom_call.1} parent=1 // pred_check_branch
      %98 = sbr.rel (0) target = $region37
    $region36: #{tpu_custom_call.1} parent=1 // pred_region
      %99 = dma.done [#allocation5], 16
    $region37: #{tpu_custom_call.1} parent=1 // pred_fallthru
      _
    %100 = vsyncpa [#allocation4], 1
    %101 = vsyncpa [#allocation7], 1
    %102 = vsyncpa [#allocation5], 1

</llo_original>
